<compile_context>
chip_gen: v7x
topology: tpu7x:2x2x1
jax: 0.10.0
libtpu: 0.0.40
codegen_flags: <defaults>
</compile_context>

<pallas_src>
import jax
import jax.numpy as jnp
from jax import lax
from jax.experimental import pallas as pl
from jax.experimental.pallas import tpu as pltpu

_MIB = 1024 * 1024


# ---------------------------------------------------------------------------
# Hardware-aware sizing helpers
# ---------------------------------------------------------------------------
def _vmem_capacity_bytes():
    try:
        info = pltpu.get_tpu_info()
        cap = getattr(info, "vmem_capacity_bytes", None)
        if cap:
            return int(cap)
    except Exception:
        pass
    return 64 * _MIB  # conservative default (v7x per-core VMEM)


def _tile_budget_bytes():
    cap = _vmem_capacity_bytes()
    # v7x (64 MiB VMEM, ~3.2 TB/s HBM): larger blocks to amortize the ~0.35us
    # per-grid-step overhead.  v5e/v6e (128 MiB VMEM): 8 MiB blocks are already
    # >=~85-95% of the HBM roofline.
    return 10 * _MIB if cap <= 80 * _MIB else 8 * _MIB


def _vmem_limit_bytes(block_bytes):
    cap = _vmem_capacity_bytes()
    need = 2 * int(sum(block_bytes)) + 2 * _MIB      # double buffering + slack
    ceil_ = max(cap - 16 * _MIB, 24 * _MIB)          # stay under physical VMEM
    return int(min(max(need, 32 * _MIB), ceil_))


def _pick_h_tile(h, row_bytes, budget):
    # Largest H tile (divisor of H, multiple of 8, or full H) within budget.
    if h * row_bytes <= budget:
        return h
    cands = [t for t in range(8, h, 8) if h % t == 0]
    fits = [t for t in cands if t * row_bytes <= budget]
    if fits:
        return max(fits)
    return min(cands) if cands else h


def _pick_h_chunk(h_tile, row_elems):
    # In-kernel streaming chunk: keep the per-chunk working set around one
    # vreg file (~64K f32 elements) so the reductions don't spill.
    max_rows = max(8, (64 * 1024) // max(row_elems, 1))
    if h_tile <= max_rows:
        return h_tile
    divs = [t for t in range(1, max_rows + 1) if h_tile % t == 0]
    div8 = [t for t in divs if t % 8 == 0]
    return max(div8) if div8 else max(divs)


def _pick_c_tile(c, want_split):
    # Channel tile for the channels-last path: full C or a multiple of 128.
    if c % 128 != 0:
        return c
    divs = [d for d in range(128, min(c, 512) + 1, 128) if c % d == 0]
    if not divs:
        return c
    if want_split:
        # Prefer >=2 channel blocks so both v7x TensorCores get work for N=1.
        split = [d for d in divs if c // d >= 2]
        if split:
            return max(split)
    return max(divs)


# ---------------------------------------------------------------------------
# Kernel 1a: channels-last dual pooling (C >= 128).  Emits raw sums.
# ---------------------------------------------------------------------------
def _make_nhwc_pool_kernel(h_tile, h_chunk):
    n_chunks = h_tile // h_chunk
    unroll = n_chunks if n_chunks <= 8 else 4

    def kernel(x_ref, oh_ref, ow_ref):
        # x_ref : (1, h_tile, W, c_tile)  native dtype
        # oh_ref: (1, h_tile, c_tile)     per-row sums over W (float32)
        # ow_ref: (1, 1, W, c_tile)       sums over H, accumulated across the
        #                                 h-block ("arbitrary") grid axis
        def body(i, acc):
            h0 = pl.multiple_of(i * h_chunk, h_chunk)
            xs = x_ref[0, pl.ds(h0, h_chunk), :, :]                     # (hc, W, c)
            oh_ref[0, pl.ds(h0, h_chunk), :] = jnp.sum(
                xs, axis=1, dtype=jnp.float32)
            return acc + jnp.sum(xs, axis=0, dtype=jnp.float32)         # (W, c)

        acc = lax.fori_loop(0, n_chunks, body,
                            jnp.zeros(ow_ref.shape[2:], jnp.float32),
                            unroll=unroll)
        hi = pl.program_id(3)

        @pl.when(hi == 0)
        def _():
            ow_ref[0, 0] = acc

        @pl.when(hi > 0)
        def _():
            ow_ref[0, 0] += acc

    return kernel


def _dual_pool_sums_nhwc(x_nhwc, block_h=None):
    """Channels-last dual pooling (C >= 128).

    Returns raw sums: sum over W -> (N, H, C); sum over H -> (N, W, C)."""
    n, h, w, c = x_nhwc.shape
    itemsize = jnp.dtype(x_nhwc.dtype).itemsize

    c_tile = _pick_c_tile(c, want_split=(n < 2))
    n_cb = c // c_tile
    budget = _tile_budget_bytes()
    h_tile = block_h if block_h is not None else _pick_h_tile(
        h, w * c_tile * itemsize, budget)
    h_chunk = _pick_h_chunk(h_tile, w * c_tile)
    n_hb = h // h_tile

    # If batch x channel blocks give <2 parallel grid units, split the H-block
    # axis into 2 parallel partials (one per v7x TensorCore); the partial
    # H-pool sums are combined in the tiny XLA epilogue.
    n_par = 2 if (n * n_cb < 2 and n_hb >= 2 and n_hb % 2 == 0) else 1
    n_hb_per = n_hb // n_par

    kernel = _make_nhwc_pool_kernel(h_tile, h_chunk)
    limit = _vmem_limit_bytes([h_tile * w * c_tile * itemsize,
                               h_tile * c_tile * 4,
                               w * c_tile * 4])

    oh, ow = pl.pallas_call(
        kernel,
        out_shape=(jax.ShapeDtypeStruct((n, h, c), jnp.float32),
                   jax.ShapeDtypeStruct((n, n_par, w, c), jnp.float32)),
        grid_spec=pltpu.PrefetchScalarGridSpec(
            num_scalar_prefetch=0,
            grid=(n, n_cb, n_par, n_hb_per),
            in_specs=[
                pl.BlockSpec((1, h_tile, w, c_tile),
                             lambda b, ci, p, hi: (b, p * n_hb_per + hi, 0, ci)),
            ],
            out_specs=(
                pl.BlockSpec((1, h_tile, c_tile),
                             lambda b, ci, p, hi: (b, p * n_hb_per + hi, ci)),
                pl.BlockSpec((1, 1, w, c_tile),
                             lambda b, ci, p, hi: (b, p, 0, ci)),
            ),
        ),
        compiler_params=pltpu.CompilerParams(
            dimension_semantics=("parallel", "parallel", "parallel", "arbitrary"),
            vmem_limit_bytes=limit),
        cost_estimate=pl.CostEstimate(
            flops=2 * n * h * w * c,
            transcendentals=0,
            bytes_accessed=n * h * w * c * itemsize
            + (n * h * c + n * n_par * w * c) * 4),
    )(x_nhwc)

    sum_h = ow[:, 0] if n_par == 1 else jnp.sum(ow, axis=1)      # (N, W, C)
    return oh, sum_h


# ---------------------------------------------------------------------------
# Kernel 1b: NCHW dual pooling for small C (< 128).  W sits on lanes, so HBM
# reads stay contiguous and lane utilization does not collapse.  Emits sums.
# ---------------------------------------------------------------------------
def _make_nchw_pool_kernel(h_tile, h_chunk):
    n_chunks = h_tile // h_chunk
    unroll = n_chunks if n_chunks <= 8 else 4

    def kernel(x_ref, oh_ref, ow_ref):
        # x_ref : (1, C, h_tile, W)  native dtype (W on the lane axis)
        # oh_ref: (1, h_tile, C)     per-row sums over W (float32)
        # ow_ref: (1, C, W)          sums over H, accumulated across h blocks
        def body(i, acc):
            h0 = pl.multiple_of(i * h_chunk, h_chunk)
            xs = x_ref[0, :, pl.ds(h0, h_chunk), :]                     # (C, hc, W)
            sw = jnp.sum(xs, axis=2, dtype=jnp.float32)                 # (C, hc)
            oh_ref[0, pl.ds(h0, h_chunk), :] = sw.T                     # (hc, C)
            return acc + jnp.sum(xs, axis=1, dtype=jnp.float32)         # (C, W)

        acc = lax.fori_loop(0, n_chunks, body,
                            jnp.zeros(ow_ref.shape[1:], jnp.float32),
                            unroll=unroll)
        hi = pl.program_id(1)

        @pl.when(hi == 0)
        def _():
            ow_ref[0] = acc

        @pl.when(hi > 0)
        def _():
            ow_ref[0] += acc

    return kernel


def _dual_pool_sums_nchw(x_nchw, block_h=None):
    """NCHW dual pooling for C < 128. Returns sums (N, H, C) and (N, W, C)."""
    n, c, h, w = x_nchw.shape
    itemsize = jnp.dtype(x_nchw.dtype).itemsize

    budget = _tile_budget_bytes()
    h_tile = block_h if block_h is not None else _pick_h_tile(
        h, c * w * itemsize, budget)
    h_chunk = _pick_h_chunk(h_tile, c * w)
    n_hb = h // h_tile

    kernel = _make_nchw_pool_kernel(h_tile, h_chunk)
    limit = _vmem_limit_bytes([c * h_tile * w * itemsize,
                               h_tile * c * 4,
                               c * w * 4])

    oh, ow = pl.pallas_call(
        kernel,
        out_shape=(jax.ShapeDtypeStruct((n, h, c), jnp.float32),
                   jax.ShapeDtypeStruct((n, c, w), jnp.float32)),
        grid_spec=pltpu.PrefetchScalarGridSpec(
            num_scalar_prefetch=0,
            grid=(n, n_hb),
            in_specs=[pl.BlockSpec((1, c, h_tile, w),
                                   lambda b, hi: (b, 0, hi, 0))],
            out_specs=(
                pl.BlockSpec((1, h_tile, c), lambda b, hi: (b, hi, 0)),
                pl.BlockSpec((1, c, w), lambda b, hi: (b, 0, 0)),
            ),
        ),
        compiler_params=pltpu.CompilerParams(
            dimension_semantics=("parallel", "arbitrary"),
            vmem_limit_bytes=limit),
        cost_estimate=pl.CostEstimate(
            flops=2 * n * h * w * c,
            transcendentals=0,
            bytes_accessed=n * h * w * c * itemsize + (n * h * c + n * w * c) * 4),
    )(x_nchw)
    # NOTE: for N==1 with many H blocks only one v7x TensorCore is used here
    # (the accumulator would need per-core partials as in the channels-last
    # path); small-C images rarely need H blocking, so this is left simple.
    return oh, jnp.transpose(ow, (0, 2, 1))      # (N, H, C), (N, W, C)


# ---------------------------------------------------------------------------
# Kernel 2: tiny 1x1 conv + bias over both pooled tensors in ONE grid step.
# The 1/W and 1/H pooling scales are folded into the two weight matrices.
# ---------------------------------------------------------------------------
def _conv1x1_kernel(sh_ref, sw_ref, wth_ref, wtw_ref, b_ref, yh_ref, yw_ref):
    b = b_ref[...]
    yh = jnp.dot(sh_ref[...], wth_ref[...],
                 preferred_element_type=jnp.float32) + b
    yw = jnp.dot(sw_ref[...], wtw_ref[...],
                 preferred_element_type=jnp.float32) + b
    yh_ref[...] = yh.astype(yh_ref.dtype)
    yw_ref[...] = yw.astype(yw_ref.dtype)


def _conv1x1(sum_w_rows, sum_h_rows, weight, bias, inv_w, inv_h, out_dtype):
    # sum_w_rows: (N, H, C) raw sums over W; sum_h_rows: (N, W, C) sums over H.
    n, h, c = sum_w_rows.shape
    w = sum_h_rows.shape[1]
    mip = weight.shape[0]

    wt = jnp.asarray(weight, jnp.float32).T               # (C, mip)
    wt_h = wt * jnp.float32(inv_w)                        # mean over W folded in
    wt_w = wt * jnp.float32(inv_h)                        # mean over H folded in
    b2 = jnp.asarray(bias, jnp.float32).reshape(1, mip)

    sh = sum_w_rows.reshape(n * h, c)
    sw = sum_h_rows.reshape(n * w, c)

    out_isz = jnp.dtype(out_dtype).itemsize
    limit = _vmem_limit_bytes([sh.size * 4, sw.size * 4,
                               n * h * mip * out_isz, n * w * mip * out_isz])

    yh, yw = pl.pallas_call(
        _conv1x1_kernel,
        out_shape=(jax.ShapeDtypeStruct((n * h, mip), out_dtype),
                   jax.ShapeDtypeStruct((n * w, mip), out_dtype)),
        grid_spec=pltpu.PrefetchScalarGridSpec(
            num_scalar_prefetch=0,
            grid=(1,),
            in_specs=[
                pl.BlockSpec((n * h, c), lambda i: (0, 0)),
                pl.BlockSpec((n * w, c), lambda i: (0, 0)),
                pl.BlockSpec((c, mip), lambda i: (0, 0)),
                pl.BlockSpec((c, mip), lambda i: (0, 0)),
                pl.BlockSpec((1, mip), lambda i: (0, 0)),
            ],
            out_specs=(
                pl.BlockSpec((n * h, mip), lambda i: (0, 0)),
                pl.BlockSpec((n * w, mip), lambda i: (0, 0)),
            ),
        ),
        compiler_params=pltpu.CompilerParams(
            dimension_semantics=("arbitrary",),
            vmem_limit_bytes=limit),
        cost_estimate=pl.CostEstimate(
            flops=2 * (n * h + n * w) * c * mip,
            transcendentals=0,
            bytes_accessed=(sh.size + sw.size + 2 * wt.size + mip) * 4
            + (n * h + n * w) * mip * out_isz),
    )(sh, sw, wt_h, wt_w, b2)
    return yh.reshape(n, h, mip), yw.reshape(n, w, mip)


# ---------------------------------------------------------------------------
# Public wrappers
# ---------------------------------------------------------------------------
def _as_2d_weight(weight):
    weight = jnp.asarray(weight)
    if weight.ndim == 4:                      # (mip, C, 1, 1) from nn.Conv2d
        weight = weight[:, :, 0, 0]
    return weight


def _finalize(yh, yw):
    y = jnp.concatenate([yh, yw], axis=1)            # (N, H+W, mip)
    return jnp.transpose(y, (0, 2, 1))[..., None]    # (N, mip, H+W, 1)


def f1_conv2d(x_nchw, weight, bias, *, _block_h=None):
    """F1_Conv2d forward. x_nchw: (N, C, H, W) (PyTorch layout).

    weight: (mip, C) or (mip, C, 1, 1); bias: (mip,).
    Returns (N, mip, H+W, 1).  `_block_h` is a test-only tile override."""
    n, c, h, w = x_nchw.shape
    weight = _as_2d_weight(weight)
    out_dtype = jnp.result_type(x_nchw.dtype, weight.dtype)
    if c >= 128:
        # Channels-last so C sits on the 128-lane axis; a channels-last
        # pipeline should call f1_conv2d_nhwc directly and skip this transpose.
        ph, pw = _dual_pool_sums_nhwc(jnp.transpose(x_nchw, (0, 2, 3, 1)),
                                      block_h=_block_h)
    else:
        # Small C: stay NCHW so W sits on lanes and HBM reads are contiguous.
        ph, pw = _dual_pool_sums_nchw(x_nchw, block_h=_block_h)
    yh, yw = _conv1x1(ph, pw, weight, bias, 1.0 / w, 1.0 / h, out_dtype)
    return _finalize(yh, yw)


def f1_conv2d_nhwc(x_nhwc, weight, bias, *, _block_h=None):
    """Same op for a channels-last (N, H, W, C) input (no transpose for C>=128)."""
    n, h, w, c = x_nhwc.shape
    weight = _as_2d_weight(weight)
    out_dtype = jnp.result_type(x_nhwc.dtype, weight.dtype)
    if c >= 128:
        ph, pw = _dual_pool_sums_nhwc(x_nhwc, block_h=_block_h)
    else:
        ph, pw = _dual_pool_sums_nchw(jnp.transpose(x_nhwc, (0, 3, 1, 2)),
                                      block_h=_block_h)
    yh, yw = _conv1x1(ph, pw, weight, bias, 1.0 / w, 1.0 / h, out_dtype)
    return _finalize(yh, yw)


def _reference(x_nchw, weight, bias):
    # Pure-JAX reference (PyTorch semantics).
    xf = x_nchw.astype(jnp.float32)
    x_h = jnp.mean(xf, axis=3)                        # (N, C, H)   mean over W
    x_w = jnp.mean(xf, axis=2)                        # (N, C, W)   mean over H
    pooled = jnp.concatenate([x_h, x_w], axis=2)      # (N, C, H+W)
    y = jnp.einsum("mc,ncl->nml", jnp.asarray(weight, jnp.float32), pooled) \
        + jnp.asarray(bias, jnp.float32)[None, :, None]
    return y[..., None]                               # (N, mip, H+W, 1)


if __name__ == "__main__":
    run = jax.jit(f1_conv2d, static_argnames=("_block_h",))

    def check(x, weight, bias, block_h=None):
        out = jax.block_until_ready(run(x, weight, bias, _block_h=block_h))
        ref = _reference(x, weight, bias)
        assert out.shape == ref.shape, (out.shape, ref.shape)
        err = float(jnp.max(jnp.abs(out.astype(jnp.float32) - ref)))
        assert jnp.allclose(out, ref, atol=1e-4, rtol=1e-5), err

    keys = jax.random.split(jax.random.PRNGKey(0), 9)

    # Module config: inp=4, reduction=32 -> mip = max(8, 4 // 32) = 8
    N, C, H, W = 2, 4, 16, 16
    mip = max(8, C // 32)
    x = jax.random.normal(keys[0], (N, C, H, W), dtype=jnp.float32)
    weight = jax.random.normal(keys[1], (mip, C), dtype=jnp.float32) * 0.1
    bias = jax.random.normal(keys[2], (mip,), dtype=jnp.float32) * 0.1
    check(x, weight, bias)

    # Extra small validations exercising the other code paths:
    #  (a) channels-last path with H blocking + the 2-way core split (N=1).
    x1 = jax.random.normal(keys[3], (1, 128, 32, 8), dtype=jnp.float32)
    w1 = jax.random.normal(keys[4], (8, 128), dtype=jnp.float32) * 0.05
    b1 = jax.random.normal(keys[5], (8,), dtype=jnp.float32) * 0.05
    check(x1, w1, b1, block_h=8)

    #  (b) small-C NCHW path with H blocking (cross-block accumulation).
    x2 = jax.random.normal(keys[6], (1, 4, 32, 16), dtype=jnp.float32)
    w2 = jax.random.normal(keys[7], (8, 4), dtype=jnp.float32) * 0.1
    b2 = jax.random.normal(keys[8], (8,), dtype=jnp.float32) * 0.1
    check(x2, w2, b2, block_h=8)

    print("KERNEL_OK")
</pallas_src>

<mosaic_0001>
module attributes {stable_mosaic.version = 11 : i64} {
  func.func @_conv1x1_kernel(%arg0: i32, %arg1: memref<32x4xf32, #tpu.memory_space<vmem>>, %arg2: memref<32x4xf32, #tpu.memory_space<vmem>>, %arg3: memref<4x8xf32, #tpu.memory_space<vmem>>, %arg4: memref<4x8xf32, #tpu.memory_space<vmem>>, %arg5: memref<1x8xf32, #tpu.memory_space<vmem>>, %arg6: memref<32x8xf32, #tpu.memory_space<vmem>>, %arg7: memref<32x8xf32, #tpu.memory_space<vmem>>) attributes {dimension_semantics = [#tpu.dimension_semantics<arbitrary>], iteration_bounds = array<i64: 1>, scalar_prefetch = 0 : i64, scratch_operands = 0 : i64, tpu.core_type = #tpu.core_type<tc>, window_params = [{pipeline_mode = #tpu.pipeline_mode<synchronous>, transform_indices = @transform_0, window_bounds = array<i64: 32, 4>}, {pipeline_mode = #tpu.pipeline_mode<synchronous>, transform_indices = @transform_1, window_bounds = array<i64: 32, 4>}, {pipeline_mode = #tpu.pipeline_mode<synchronous>, transform_indices = @transform_2, window_bounds = array<i64: 4, 8>}, {pipeline_mode = #tpu.pipeline_mode<synchronous>, transform_indices = @transform_3, window_bounds = array<i64: 4, 8>}, {pipeline_mode = #tpu.pipeline_mode<synchronous>, transform_indices = @transform_4, window_bounds = array<i64: 1, 8>}, {pipeline_mode = #tpu.pipeline_mode<synchronous>, transform_indices = @transform_5, window_bounds = array<i64: 32, 8>}, {pipeline_mode = #tpu.pipeline_mode<synchronous>, transform_indices = @transform_6, window_bounds = array<i64: 32, 8>}]} {
    %c0 = arith.constant 0 : index
    %c0_0 = arith.constant 0 : index
    %0 = vector.load %arg5[%c0, %c0_0] : memref<1x8xf32, #tpu.memory_space<vmem>>, vector<1x8xf32>
    %c0_1 = arith.constant 0 : index
    %c0_2 = arith.constant 0 : index
    %1 = vector.load %arg1[%c0_1, %c0_2] : memref<32x4xf32, #tpu.memory_space<vmem>>, vector<32x4xf32>
    %c0_3 = arith.constant 0 : index
    %c0_4 = arith.constant 0 : index
    %2 = vector.load %arg3[%c0_3, %c0_4] : memref<4x8xf32, #tpu.memory_space<vmem>>, vector<4x8xf32>
    %cst = arith.constant dense<0.000000e+00> : vector<32x8xf32>
    %3 = tpu.matmul %1, %2, %cst {dimension_numbers = #tpu.dot_dimension_numbers<[1], [0], [0], [1], [0, 0, 1, 1], [], []>} : vector<32x4xf32>, vector<4x8xf32>, vector<32x8xf32> -> vector<32x8xf32>
    %4 = vector.broadcast %0 : vector<1x8xf32> to vector<32x8xf32>
    %5 = arith.addf %3, %4 : vector<32x8xf32>
    %c0_5 = arith.constant 0 : index
    %c0_6 = arith.constant 0 : index
    %6 = vector.load %arg2[%c0_5, %c0_6] : memref<32x4xf32, #tpu.memory_space<vmem>>, vector<32x4xf32>
    %c0_7 = arith.constant 0 : index
    %c0_8 = arith.constant 0 : index
    %7 = vector.load %arg4[%c0_7, %c0_8] : memref<4x8xf32, #tpu.memory_space<vmem>>, vector<4x8xf32>
    %cst_9 = arith.constant dense<0.000000e+00> : vector<32x8xf32>
    %8 = tpu.matmul %6, %7, %cst_9 {dimension_numbers = #tpu.dot_dimension_numbers<[1], [0], [0], [1], [0, 0, 1, 1], [], []>} : vector<32x4xf32>, vector<4x8xf32>, vector<32x8xf32> -> vector<32x8xf32>
    %9 = vector.broadcast %0 : vector<1x8xf32> to vector<32x8xf32>
    %10 = arith.addf %8, %9 : vector<32x8xf32>
    %c0_10 = arith.constant 0 : index
    %c0_11 = arith.constant 0 : index
    %11 = vector.load %arg6[%c0_10, %c0_11] : memref<32x8xf32, #tpu.memory_space<vmem>>, vector<32x8xf32>
    tpu.vector_store %arg6[%c0_10, %c0_11], %5 {strides = array<i32>} : memref<32x8xf32, #tpu.memory_space<vmem>>, vector<32x8xf32>,
    %c0_12 = arith.constant 0 : index
    %c0_13 = arith.constant 0 : index
    %12 = vector.load %arg7[%c0_12, %c0_13] : memref<32x8xf32, #tpu.memory_space<vmem>>, vector<32x8xf32>
    tpu.vector_store %arg7[%c0_12, %c0_13], %10 {strides = array<i32>} : memref<32x8xf32, #tpu.memory_space<vmem>>, vector<32x8xf32>,
    return
  }
  func.func @transform_0(%arg0: i32) -> (i32, i32) {
    %c0_i32 = arith.constant 0 : i32
    %c0_i32_0 = arith.constant 0 : i32
    %c0_i32_1 = arith.constant 0 : i32
    return %c0_i32, %c0_i32_0 : i32, i32
  }
  func.func @transform_1(%arg0: i32) -> (i32, i32) {
    %c0_i32 = arith.constant 0 : i32
    %c0_i32_0 = arith.constant 0 : i32
    %c0_i32_1 = arith.constant 0 : i32
    return %c0_i32, %c0_i32_0 : i32, i32
  }
  func.func @transform_2(%arg0: i32) -> (i32, i32) {
    %c0_i32 = arith.constant 0 : i32
    %c0_i32_0 = arith.constant 0 : i32
    %c0_i32_1 = arith.constant 0 : i32
    return %c0_i32, %c0_i32_0 : i32, i32
  }
  func.func @transform_3(%arg0: i32) -> (i32, i32) {
    %c0_i32 = arith.constant 0 : i32
    %c0_i32_0 = arith.constant 0 : i32
    %c0_i32_1 = arith.constant 0 : i32
    return %c0_i32, %c0_i32_0 : i32, i32
  }
  func.func @transform_4(%arg0: i32) -> (i32, i32) {
    %c0_i32 = arith.constant 0 : i32
    %c0_i32_0 = arith.constant 0 : i32
    %c0_i32_1 = arith.constant 0 : i32
    return %c0_i32, %c0_i32_0 : i32, i32
  }
  func.func @transform_5(%arg0: i32) -> (i32, i32) {
    %c0_i32 = arith.constant 0 : i32
    %c0_i32_0 = arith.constant 0 : i32
    %c0_i32_1 = arith.constant 0 : i32
    return %c0_i32, %c0_i32_0 : i32, i32
  }
  func.func @transform_6(%arg0: i32) -> (i32, i32) {
    %c0_i32 = arith.constant 0 : i32
    %c0_i32_0 = arith.constant 0 : i32
    %c0_i32_1 = arith.constant 0 : i32
    return %c0_i32, %c0_i32_0 : i32, i32
  }
}

module attributes {stable_mosaic.version = 11 : i64} {
  func.func @kernel(%arg0: i32, %arg1: i32, %arg2: memref<1x4x16x16xf32, #tpu.memory_space<vmem>>, %arg3: memref<1x16x4xf32, #tpu.memory_space<vmem>>, %arg4: memref<1x4x16xf32, #tpu.memory_space<vmem>>) attributes {dimension_semantics = [#tpu.dimension_semantics<parallel>, #tpu.dimension_semantics<arbitrary>], iteration_bounds = array<i64: 2, 1>, scalar_prefetch = 0 : i64, scratch_operands = 0 : i64, tpu.core_type = #tpu.core_type<tc>, window_params = [{transform_indices = @transform_0, window_bounds = array<i64: 1, 4, 16, 16>}, {transform_indices = @transform_1, window_bounds = array<i64: 1, 16, 4>}, {transform_indices = @transform_2, window_bounds = array<i64: 1, 4, 16>}]} {
    %cst = arith.constant 0.000000e+00 : f32
    %0 = vector.broadcast %cst : f32 to vector<4x16xf32>
    %c0_i32 = arith.constant 0 : i32
    %c16_i32 = arith.constant 16 : i32
    %1 = arith.muli %c0_i32, %c16_i32 : i32
    %2 = tpu.assume_multiple %1, 16 : i32
    %c0 = arith.constant 0 : index
    %c0_0 = arith.constant 0 : index
    %3 = arith.index_cast %2 : i32 to index
    %c0_1 = arith.constant 0 : index
    %4 = vector.load %arg2[%c0, %c0_0, %3, %c0_1] : memref<1x4x16x16xf32, #tpu.memory_space<vmem>>, vector<1x4x16x16xf32>
    %5 = vector.shape_cast %4 : vector<1x4x16x16xf32> to vector<4x16x16xf32>
    %cst_2 = arith.constant dense<0.000000e+00> : vector<4x16xf32>
    %6 = vector.multi_reduction <add>, %5, %cst_2 [2] : vector<4x16x16xf32> to vector<4x16xf32>
    %7 = tpu.transpose %6, [1, 0] : vector<4x16xf32> -> vector<16x4xf32>
    %c0_3 = arith.constant 0 : index
    %8 = arith.index_cast %2 : i32 to index
    %c0_4 = arith.constant 0 : index
    %9 = vector.load %arg3[%c0_3, %8, %c0_4] : memref<1x16x4xf32, #tpu.memory_space<vmem>>, vector<1x16x4xf32>
    %10 = vector.shape_cast %9 : vector<1x16x4xf32> to vector<16x4xf32>
    %11 = vector.shape_cast %7 : vector<16x4xf32> to vector<1x16x4xf32>
    tpu.vector_store %arg3[%c0_3, %8, %c0_4], %11 {strides = array<i32>} : memref<1x16x4xf32, #tpu.memory_space<vmem>>, vector<1x16x4xf32>,
    %cst_5 = arith.constant dense<0.000000e+00> : vector<4x16xf32>
    %12 = vector.multi_reduction <add>, %5, %cst_5 [1] : vector<4x16x16xf32> to vector<4x16xf32>
    %13 = arith.addf %0, %12 : vector<4x16xf32>
    %c1_i32 = arith.constant 1 : i32
    %c0_i32_6 = arith.constant 0 : i32
    %14 = arith.cmpi eq, %arg1, %c0_i32_6 : i32
    %15 = arith.extui %14 : i1 to i32
    %c0_i32_7 = arith.constant 0 : i32
    %16 = arith.cmpi ne, %15, %c0_i32_7 : i32
    scf.if %16 {
      %c0_10 = arith.constant 0 : index
      %c0_11 = arith.constant 0 : index
      %c0_12 = arith.constant 0 : index
      %20 = vector.load %arg4[%c0_10, %c0_11, %c0_12] : memref<1x4x16xf32, #tpu.memory_space<vmem>>, vector<1x4x16xf32>
      %21 = vector.shape_cast %20 : vector<1x4x16xf32> to vector<4x16xf32>
      %22 = vector.shape_cast %13 : vector<4x16xf32> to vector<1x4x16xf32>
      tpu.vector_store %arg4[%c0_10, %c0_11, %c0_12], %22 {strides = array<i32>} : memref<1x4x16xf32, #tpu.memory_space<vmem>>, vector<1x4x16xf32>,
    } else {
    }
    %c0_i32_8 = arith.constant 0 : i32
    %17 = arith.cmpi sgt, %arg1, %c0_i32_8 : i32
    %18 = arith.extui %17 : i1 to i32
    %c0_i32_9 = arith.constant 0 : i32
    %19 = arith.cmpi ne, %18, %c0_i32_9 : i32
    scf.if %19 {
      %c0_10 = arith.constant 0 : index
      %c0_11 = arith.constant 0 : index
      %c0_12 = arith.constant 0 : index
      %20 = vector.load %arg4[%c0_10, %c0_11, %c0_12] : memref<1x4x16xf32, #tpu.memory_space<vmem>>, vector<1x4x16xf32>
      %21 = vector.shape_cast %20 : vector<1x4x16xf32> to vector<4x16xf32>
      %22 = arith.addf %21, %13 : vector<4x16xf32>
      %c0_13 = arith.constant 0 : index
      %c0_14 = arith.constant 0 : index
      %c0_15 = arith.constant 0 : index
      %23 = vector.load %arg4[%c0_13, %c0_14, %c0_15] : memref<1x4x16xf32, #tpu.memory_space<vmem>>, vector<1x4x16xf32>
      %24 = vector.shape_cast %23 : vector<1x4x16xf32> to vector<4x16xf32>
      %25 = vector.shape_cast %22 : vector<4x16xf32> to vector<1x4x16xf32>
      tpu.vector_store %arg4[%c0_13, %c0_14, %c0_15], %25 {strides = array<i32>} : memref<1x4x16xf32, #tpu.memory_space<vmem>>, vector<1x4x16xf32>,
    } else {
    }
    return
  }
  func.func @transform_0(%arg0: i32, %arg1: i32) -> (i32, i32, i32, i32) {
    %c0_i32 = arith.constant 0 : i32
    %c0_i32_0 = arith.constant 0 : i32
    %c0_i32_1 = arith.constant 0 : i32
    return %arg0, %c0_i32, %arg1, %c0_i32_0 : i32, i32, i32, i32
  }
  func.func @transform_1(%arg0: i32, %arg1: i32) -> (i32, i32, i32) {
    %c0_i32 = arith.constant 0 : i32
    %c0_i32_0 = arith.constant 0 : i32
    return %arg0, %arg1, %c0_i32 : i32, i32, i32
  }
  func.func @transform_2(%arg0: i32, %arg1: i32) -> (i32, i32, i32) {
    %c0_i32 = arith.constant 0 : i32
    %c0_i32_0 = arith.constant 0 : i32
    %c0_i32_1 = arith.constant 0 : i32
    return %arg0, %c0_i32, %c0_i32_0 : i32, i32, i32
  }
}

</mosaic_0001>

<llo_original>
// kernel: f1_conv2d.2
$region0: #{f1_conv2d.2}
  #allocation0 [shape = 'u32[]', space=smem, size = 0x4, offset = 0x4, fixed_abs, tag = 'smem constant byte address 0x4 - core index']
  #allocation1 [shape = 'u32[144,128]{1,0:T(1,128)}', space=vmem, size = 0x12000, scoped, tag = 'internal scratch']
  %s0 = inlined_call_operand.hbm [shape: f32[2,4,16,16], index: 0, kind: input, shape index: {}]
  %s1 = inlined_call_operand.vmem [shape: f32[2,16,4], index: 1, kind: output, shape index: {0}]
  %s2 = inlined_call_operand.vmem [shape: f32[2,4,16], index: 2, kind: output, shape index: {1}]
  %3 = xla_tuple %s1, %s2
  %s4 = sld [smem:[#allocation0]]
  $region57: #{f1_conv2d.2} parent=0
    _
  %s6 = ssub.s32 1, %s4
  %s7 = scalar_select 0, %s6, %s4
  $region1: #{f1_conv2d.2} parent=0
    #allocation2 [shape = 'u8[65536]{0}', space=vmem, size = 0x10000, scoped, tag = 'input window, operand 0']
    #allocation3 [shape = 's32[2]{0}', space=sflag, size = 0x8, scoped, tag = 'scoped memory for f1_conv2d.2']
    %8 = vsyncpa [#allocation3], 0
    %s9 = scalar_lea.sflag [#allocation3], 1
    %10 = vsyncpa %s9, 0
    loop: start=0, step=1, limit=4
    $region2: #{f1_conv2d.2} parent=1 // loop_pre_header
      _
    $region3: #{f1_conv2d.2} parent=1 // loop_header
      %s12 = sphi 0, %s16
      %p13 = scmp.ge.s32.totalorder %s12, 4
      %s19 = sphi 0, %s31
      %s20 = sphi 0, %s27
      %s21 = sphi 0, %s19
      %s22 = sphi 0, %s20
      %s23 = sphi 0, %s21
      %s24 = sphi 0, %s22
      %s36 = sphi 0, %s38
      %s39 = sphi 0, %s36
      %s40 = sphi 0, %s39
      %s56 = sphi 0, %s40
      %s64 = sphi 0, %s66
      %s67 = sphi 0, %s64
      %s68 = sphi 0, %s67
      %s84 = sphi 0, %s68
      %s90 = sphi 0, %s92
      %s93 = sphi 0, %s90
      %s94 = sphi 0, %s93
      %s110 = sphi 0, %s94
    $region4: #{f1_conv2d.2} parent=1 // loop_header_branch
      %15 = sbr.rel (%p13) target = $region8
    $region5: #{f1_conv2d.2} parent=1 // loop_body
      %s17 = ssub.s32 %s12, 1
      %s18 = ssub.s32 %s12, 2
      %s25 = sadd.s32 1, %s20
      %p26 = scmp.ge.s32.totalorder %s25, 1
      %s27 = scalar_select %p26, 0, %s25
      %s28 = sadd.s32 1, %s19
      %s29 = scalar_select %p26, %s28, %s19
      %p30 = scmp.ge.s32.totalorder %s29, 2
      %s31 = scalar_select %p30, 0, %s29
      %s32 = ssub.s32 %s19, %s31
      %s33 = ssub.s32 %s20, %s27
      %s34 = sor.u32 %s32, %s33
      %p35 = scmp.eq.s32.totalorder %s34, 0
      %s37 = sadd.s32 %s36, 1
      %s38 = scalar_select %p35, %s36, %s37
      %p41 = pneg %p35
      %p42 = scmp.eq.s32.totalorder %s12, 1
      %p43 = por %p41, %p42
      %p44 = scmp.ne.s32.totalorder %s36, %s39
      %p45 = scmp.eq.s32.totalorder %s12, 0
      %p46 = por %p44, %p45
      %p47 = scmp.ne.s32.totalorder %s36, %s39
      %p48 = scmp.eq.s32.totalorder %s17, 1
      %p49 = por %p47, %p48
      %p50 = scmp.ne.s32.totalorder %s39, %s40
      %p51 = scmp.eq.s32.totalorder %s17, 0
      %p52 = por %p50, %p51
      %p53 = scmp.ne.s32.totalorder %s39, %s40
      %p54 = scmp.eq.s32.totalorder %s18, 1
      %p55 = por %p53, %p54
      %p57 = scmp.ne.s32.totalorder %s40, %s56
      %p58 = scmp.eq.s32.totalorder %s18, 0
      %p59 = por %p57, %p58
      %s60 = ssub.s32 %s19, %s31
      %s61 = ssub.s32 %s20, %s27
      %s62 = sor.u32 %s60, %s61
      %p63 = scmp.eq.s32.totalorder %s62, 0
      %s65 = sadd.s32 %s64, 1
      %s66 = scalar_select %p63, %s64, %s65
      %p69 = pneg %p63
      %p70 = scmp.eq.s32.totalorder %s12, 1
      %p71 = por %p69, %p70
      %p72 = scmp.ne.s32.totalorder %s64, %s67
      %p73 = scmp.eq.s32.totalorder %s12, 0
      %p74 = por %p72, %p73
      %p75 = scmp.ne.s32.totalorder %s64, %s67
      %p76 = scmp.eq.s32.totalorder %s17, 1
      %p77 = por %p75, %p76
      %p78 = scmp.ne.s32.totalorder %s67, %s68
      %p79 = scmp.eq.s32.totalorder %s17, 0
      %p80 = por %p78, %p79
      %p81 = scmp.ne.s32.totalorder %s67, %s68
      %p82 = scmp.eq.s32.totalorder %s18, 1
      %p83 = por %p81, %p82
      %p85 = scmp.ne.s32.totalorder %s68, %s84
      %p86 = scmp.eq.s32.totalorder %s18, 0
      %p87 = por %p85, %p86
      %s88 = ssub.s32 %s19, %s31
      %p89 = scmp.eq.s32.totalorder %s88, 0
      %s91 = sadd.s32 %s90, 1
      %s92 = scalar_select %p89, %s90, %s91
      %p95 = pneg %p89
      %p96 = scmp.eq.s32.totalorder %s12, 1
      %p97 = por %p95, %p96
      %p98 = scmp.ne.s32.totalorder %s90, %s93
      %p99 = scmp.eq.s32.totalorder %s12, 0
      %p100 = por %p98, %p99
      %p101 = scmp.ne.s32.totalorder %s90, %s93
      %p102 = scmp.eq.s32.totalorder %s17, 1
      %p103 = por %p101, %p102
      %p104 = scmp.ne.s32.totalorder %s93, %s94
      %p105 = scmp.eq.s32.totalorder %s17, 0
      %p106 = por %p104, %p105
      %p107 = scmp.ne.s32.totalorder %s93, %s94
      %p108 = scmp.eq.s32.totalorder %s18, 1
      %p109 = por %p107, %p108
      %p111 = scmp.ne.s32.totalorder %s94, %s110
      %p112 = scmp.eq.s32.totalorder %s18, 0
      %p113 = por %p111, %p112
      %p114 = scmp.le.s32.totalorder 1, %s12
      %p115 = scmp.lt.s32.totalorder %s12, 3
      %p116 = pnand %p114, %p115
      %p117 = pneg %p116
      // Predicated region
      $region9: #{f1_conv2d.2} parent=5 // pred_check
        _
      $region10: #{f1_conv2d.2} parent=5 // pred_check_branch
        %119 = sbr.rel (%p116) target = $region12
      $region11: #{f1_conv2d.2} parent=5 // pred_region
        %s120 = ssub.s32 %s12, 1
      $region12: #{f1_conv2d.2} parent=5 // pred_fallthru
        _
      %p121 = scmp.lt.s32.totalorder %s12, 2
      // Predicated region
      $region13: #{f1_conv2d.2} parent=5 // pred_check
        %p122 = pneg %p121
      $region14: #{f1_conv2d.2} parent=5 // pred_check_branch
        %124 = sbr.rel (%p122) target = $region16
      $region15: #{f1_conv2d.2} parent=5 // pred_region
        // Predicated region
        $region17: #{f1_conv2d.2} parent=15 // pred_check
          %p125 = pneg %p46
        $region18: #{f1_conv2d.2} parent=15 // pred_check_branch
          %127 = sbr.rel (%p125) target = $region20
        $region19: #{f1_conv2d.2} parent=15 // pred_region
          %s128 = sand.u32 %s36, 1
          %s129 = scalar_lea.sflag [#allocation3], %s128
          %s130 = sand.u32 %s36, 1
          %s131 = smul.addr %s130, 64
          %s132 = scalar_lea.vmem [#allocation2], %s131
          %s133 = smul.u32 2, %s20
          %s135 = ssub.s32 1024, 1024
          %136 = vsyncadd %s129, %s135
          %s137 = smul.addr %s19, 8
          %s138 = sadd.s32 %s133, %s137
          %s139 = smul.addr %s138, 128
          %s140 = scalar_lea.hbm %s0, %s139
          %s141 = sshll.u32 %s132, 4
          %s142 = int_to_ptr.vmem [resolvable:$true] %s141
          %147 = dma.hbm_to_vmem [thread:$0]  %s140, 1024, %s142, %s129, 128, 128, 8
        $region20: #{f1_conv2d.2} parent=15 // pred_fallthru
          _
      $region16: #{f1_conv2d.2} parent=5 // pred_fallthru
        _
      %p148 = scmp.le.s32.totalorder 1, %s12
      %p149 = scmp.lt.s32.totalorder %s12, 3
      %p150 = pnand %p148, %p149
      %p151 = pneg %p150
      // Predicated region
      $region21: #{f1_conv2d.2} parent=5 // pred_check
        _
      $region22: #{f1_conv2d.2} parent=5 // pred_check_branch
        %153 = sbr.rel (%p150) target = $region24
      $region23: #{f1_conv2d.2} parent=5 // pred_region
        %s154 = ssub.s32 %s12, 1
        %s155 = sand.u32 %s39, 1
        %s156 = scalar_lea.sflag [#allocation3], %s155
        %s157 = sand.u32 %s39, 1
        %s158 = smul.addr %s157, 64
        %s159 = scalar_lea.vmem [#allocation2], %s158
        // Predicated region
        $region25: #{f1_conv2d.2} parent=23 // pred_check
          %p160 = pneg %p52
        $region26: #{f1_conv2d.2} parent=23 // pred_check_branch
          %162 = sbr.rel (%p160) target = $region28
        $region27: #{f1_conv2d.2} parent=23 // pred_region
          %163 = dma.done %s156, 1024
        $region28: #{f1_conv2d.2} parent=23 // pred_fallthru
          _
        %s164 = sand.u32 %s39, 1
        %s165 = scalar_lea.sflag [#allocation3], %s164
        %s166 = sand.u32 %s39, 1
        %s167 = smul.addr %s166, 64
        %s168 = scalar_lea.vmem [#allocation2], %s167
        %p169 = pneg %p52
        %p170 = pneg %p49
        %p171 = pneg %p80
        %p172 = pneg %p77
        %s173 = smul.u32 2, %s22
        %p174 = scmp.lt.s32.totalorder %s21, 1
        %s175 = scalar_select %p174, %s21, 1
        %p176 = scmp.lt.s32.totalorder %s173, 1
        %s177 = scalar_select %p176, %s173, 1
        %s178 = smul.addr %s175, 2
        %s179 = sadd.s32 %s177, %s178
        %s180 = smul.addr %s179, 8
        %s181 = scalar_lea.vmem %s1, %s180
        %p182 = pneg %p106
        %p183 = pneg %p103
        %p184 = scmp.lt.s32.totalorder %s21, 1
        %s185 = scalar_select %p184, %s21, 1
        %s186 = smul.addr %s185, 4
        %s187 = scalar_lea.vmem %s2, %s186
        %s188 = smul.u32 2, %s22
        %s189 = smul.u32 2, %s22
        %p190 = scmp.lt.s32.totalorder %s21, 1
        %s191 = scalar_select %p190, %s21, 1
        %p192 = scmp.lt.s32.totalorder %s189, 1
        %s193 = scalar_select %p192, %s189, 1
        %s194 = smul.addr %s191, 2
        %s195 = sadd.s32 %s193, %s194
        %s196 = smul.addr %s195, 8
        %s197 = scalar_lea.vmem %s1, %s196
        %s198 = smul.u32 2, %s22
        %p199 = scmp.lt.s32.totalorder %s21, 1
        %s200 = scalar_select %p199, %s21, 1
        %s201 = smul.addr %s200, 4
        %s202 = scalar_lea.vmem %s2, %s201
        %v203 = vld [vmem:[%s159] sm:$0xff]
        %v204 = vld [vmem:[%s159 + $0x8] sm:$0xff]
        %v205 = vld [vmem:[%s159 + $0x10] sm:$0xff]
        %v206 = vld [vmem:[%s159 + $0x18] sm:$0xff]
        %v207 = vld [vmem:[%s159 + $0x20] sm:$0xff]
        %v208 = vld [vmem:[%s159 + $0x28] sm:$0xff]
        %v209 = vld [vmem:[%s159 + $0x30] sm:$0xff]
        %v210 = vld [vmem:[%s159 + $0x38] sm:$0xff]
        %vm211 = vcmask 130048
        %v212 = vsel %vm211, %v203, 0.0
        %213 = vadd.xlane.f32.xlu0 %v212
        %v214 = vpop.xlane.xlu0 %213
        %v215 = vsel %vm211, %v204, 0.0
        %216 = vadd.xlane.f32.xlu0 %v215
        %v217 = vpop.xlane.xlu0 %216
        %v218 = vsel %vm211, %v205, 0.0
        %219 = vadd.xlane.f32.xlu0 %v218
        %v220 = vpop.xlane.xlu0 %219
        %v221 = vsel %vm211, %v206, 0.0
        %222 = vadd.xlane.f32.xlu0 %v221
        %v223 = vpop.xlane.xlu0 %222
        %v224 = vsel %vm211, %v207, 0.0
        %225 = vadd.xlane.f32.xlu0 %v224
        %v226 = vpop.xlane.xlu0 %225
        %v227 = vsel %vm211, %v208, 0.0
        %228 = vadd.xlane.f32.xlu0 %v227
        %v229 = vpop.xlane.xlu0 %228
        %v230 = vsel %vm211, %v209, 0.0
        %231 = vadd.xlane.f32.xlu0 %v230
        %v232 = vpop.xlane.xlu0 %231
        %v233 = vsel %vm211, %v210, 0.0
        %234 = vadd.xlane.f32.xlu0 %v233
        %v235 = vpop.xlane.xlu0 %234
        %v244 = vlaneseq
        %v245 = vand.u32 %v244, 127
        %v246 = vlaneseq
        %v247 = vshrl.u32 %v246, 7
        %v248 = vsub.s32 %v245, %v247
        %v249 = vrot.slane %v214, %v248
        %v250 = vadd.s32 %v245, 4294967288
        %v251 = vlaneseq
        %v252 = vshrl.u32 %v251, 7
        %v253 = vsub.s32 %v250, %v252
        %v254 = vrot.slane %v217, %v253
        %vm255 = vcmask 130112
        %v256 = vsel %vm255, %v254, %v249
        %v257 = vlaneseq
        %v258 = vshrl.u32 %v257, 7
        %v259 = vsub.s32 %v245, %v258
        %v260 = vrot.slane %v220, %v259
        %v261 = vlaneseq
        %v262 = vshrl.u32 %v261, 7
        %v263 = vsub.s32 %v250, %v262
        %v264 = vrot.slane %v223, %v263
        %v265 = vsel %vm255, %v264, %v260
        %v266 = vlaneseq
        %v267 = vshrl.u32 %v266, 7
        %v268 = vsub.s32 %v245, %v267
        %v269 = vrot.slane %v226, %v268
        %v270 = vlaneseq
        %v271 = vshrl.u32 %v270, 7
        %v272 = vsub.s32 %v250, %v271
        %v273 = vrot.slane %v229, %v272
        %v274 = vsel %vm255, %v273, %v269
        %v275 = vlaneseq
        %v276 = vshrl.u32 %v275, 7
        %v277 = vsub.s32 %v245, %v276
        %v278 = vrot.slane %v232, %v277
        %v279 = vlaneseq
        %v280 = vshrl.u32 %v279, 7
        %v281 = vsub.s32 %v250, %v280
        %v282 = vrot.slane %v235, %v281
        %v283 = vsel %vm255, %v282, %v278
        %vm284 = vcmask 1041409
        %v285 = vsel %vm284, %v265, %v256
        %vm286 = vcmask 1042434
        %v287 = vsel %vm286, %v274, %v285
        %vm288 = vcmask 1043459
        %v289 = vsel %vm288, %v283, %v287
        %291 = vxpose.xlu0.b32.start [1/16] %v289, 128
        %292 = vxpose.xlu0.b32.cont [2/16] 0.0, 128
        %293 = vxpose.xlu0.b32.cont [3/16] 0.0, 128
        %294 = vxpose.xlu0.b32.cont [4/16] 0.0, 128
        %295 = vxpose.xlu0.b32.cont [5/16] 0.0, 128
        %296 = vxpose.xlu0.b32.cont [6/16] 0.0, 128
        %297 = vxpose.xlu0.b32.cont [7/16] 0.0, 128
        %298 = vxpose.xlu0.b32.cont [8/16] 0.0, 128
        %299 = vxpose.xlu0.b32.cont [9/16] 0.0, 128
        %300 = vxpose.xlu0.b32.cont [10/16] 0.0, 128
        %301 = vxpose.xlu0.b32.cont [11/16] 0.0, 128
        %302 = vxpose.xlu0.b32.cont [12/16] 0.0, 128
        %303 = vxpose.xlu0.b32.cont [13/16] 0.0, 128
        %304 = vxpose.xlu0.b32.cont [14/16] 0.0, 128
        %305 = vxpose.xlu0.b32.cont [15/16] 0.0, 128
        %306 = vxpose.xlu0.b32.end [16/16] 0.0, 128
        %v307 = vpop.trf.xlu0
        %v308 = vpop.trf.xlu0
        %v309 = vpop.trf.xlu0
        %v310 = vpop.trf.xlu0
        %v311 = vpop.trf.xlu0
        %v312 = vpop.trf.xlu0
        %v313 = vpop.trf.xlu0
        %v314 = vpop.trf.xlu0
        %v315 = vpop.trf.xlu0
        %v316 = vpop.trf.xlu0
        %v317 = vpop.trf.xlu0
        %v318 = vpop.trf.xlu0
        %v319 = vpop.trf.xlu0
        %v320 = vpop.trf.xlu0
        %v321 = vpop.trf.xlu0
        %v322 = vpop.trf.xlu0
        %vm323 = vcmask 31744
        %324 = vst.msk [vmem:[%s197] sm:$0xff] %vm323, %v307
        %325 = vst.msk [vmem:[%s197 + $0x8] sm:$0xff] %vm323, %v308
        %v326 = vadd.f32 %v212, %v215
        %v327 = vrot.slane %v326, 4
        %v328 = vadd.f32 %v326, %v327
        %v329 = vrot.slane %v328, 2
        %v330 = vadd.f32 %v328, %v329
        %v331 = vrot.slane %v330, 1
        %v332 = vadd.f32 %v330, %v331
        %v333 = vadd.f32 %v218, %v221
        %v334 = vrot.slane %v333, 4
        %v335 = vadd.f32 %v333, %v334
        %v336 = vrot.slane %v335, 2
        %v337 = vadd.f32 %v335, %v336
        %v338 = vrot.slane %v337, 1
        %v339 = vadd.f32 %v337, %v338
        %v340 = vadd.f32 %v224, %v227
        %v341 = vrot.slane %v340, 4
        %v342 = vadd.f32 %v340, %v341
        %v343 = vrot.slane %v342, 2
        %v344 = vadd.f32 %v342, %v343
        %v345 = vrot.slane %v344, 1
        %v346 = vadd.f32 %v344, %v345
        %v347 = vadd.f32 %v230, %v233
        %v348 = vrot.slane %v347, 4
        %v349 = vadd.f32 %v347, %v348
        %v350 = vrot.slane %v349, 2
        %v351 = vadd.f32 %v349, %v350
        %v352 = vrot.slane %v351, 1
        %v353 = vadd.f32 %v351, %v352
        %v354 = vadd.f32 %v332, 0.0
        %v355 = vadd.f32 %v339, 0.0
        %v356 = vadd.f32 %v346, 0.0
        %v357 = vadd.f32 %v353, 0.0
        %p358 = scmp.eq.s32.totalorder %s22, 0
        // Predicated region
        $region29: #{f1_conv2d.2} parent=23 // pred_check
          %p359 = pneg %p358
        $region30: #{f1_conv2d.2} parent=23 // pred_check_branch
          %361 = sbr.rel (%p359) target = $region32
        $region31: #{f1_conv2d.2} parent=23 // pred_region
          %v366 = vsel %vm284, %v355, %v354
          %v367 = vsel %vm286, %v356, %v366
          %v368 = vsel %vm288, %v357, %v367
          %vm370 = vcmask 125952
          %371 = vst.msk [vmem:[%s202] sm:$0xf] %vm370, %v368
        $region32: #{f1_conv2d.2} parent=23 // pred_fallthru
          _
        %p372 = scmp.gt.s32.totalorder %s22, 0
        // Predicated region
        $region33: #{f1_conv2d.2} parent=23 // pred_check
          %p373 = pneg %p372
        $region34: #{f1_conv2d.2} parent=23 // pred_check_branch
          %375 = sbr.rel (%p373) target = $region36
        $region35: #{f1_conv2d.2} parent=23 // pred_region
          %v376 = vld [vmem:[%s202] sm:$0xf]
          %v381 = vsel %vm284, %v355, %v354
          %v382 = vsel %vm286, %v356, %v381
          %v383 = vsel %vm288, %v357, %v382
          %v385 = vadd.f32 %v376, %v383
          %vm386 = vcmask 125952
          %387 = vst.msk [vmem:[%s202] sm:$0xf] %vm386, %v385
        $region36: #{f1_conv2d.2} parent=23 // pred_fallthru
          _
        %s388 = smul.u32 2, %s22
        %p389 = scmp.lt.s32.totalorder %s21, 1
        %s390 = scalar_select %p389, %s21, 1
        %p391 = scmp.lt.s32.totalorder %s388, 1
        %s392 = scalar_select %p391, %s388, 1
        %s393 = smul.addr %s390, 2
        %s394 = sadd.s32 %s392, %s393
        %s395 = smul.addr %s394, 8
        %s396 = scalar_lea.vmem %s1, %s395
        %p397 = scmp.lt.s32.totalorder %s21, 1
        %s398 = scalar_select %p397, %s21, 1
        %s399 = smul.addr %s398, 4
        %s400 = scalar_lea.vmem %s2, %s399
        // Predicated region
        $region37: #{f1_conv2d.2} parent=23 // pred_check
          %p401 = pneg %p77
        $region38: #{f1_conv2d.2} parent=23 // pred_check_branch
          %403 = sbr.rel (%p401) target = $region40
        $region39: #{f1_conv2d.2} parent=23 // pred_region
          %s404 = smul.u32 2, %s22
        $region40: #{f1_conv2d.2} parent=23 // pred_fallthru
          _
        // Predicated region
        $region41: #{f1_conv2d.2} parent=23 // pred_check
          %p405 = pneg %p103
        $region42: #{f1_conv2d.2} parent=23 // pred_check_branch
          %407 = sbr.rel (%p405) target = $region44
        $region43: #{f1_conv2d.2} parent=23 // pred_region
          _
        $region44: #{f1_conv2d.2} parent=23 // pred_fallthru
          _
      $region24: #{f1_conv2d.2} parent=5 // pred_fallthru
        _
      %p408 = scmp.le.s32.totalorder 2, %s12
      // Predicated region
      $region45: #{f1_conv2d.2} parent=5 // pred_check
        %p409 = pneg %p408
      $region46: #{f1_conv2d.2} parent=5 // pred_check_branch
        %411 = sbr.rel (%p409) target = $region48
      $region47: #{f1_conv2d.2} parent=5 // pred_region
        %s412 = ssub.s32 %s12, 2
        // Predicated region
        $region49: #{f1_conv2d.2} parent=47 // pred_check
          %p413 = pneg %p83
        $region50: #{f1_conv2d.2} parent=47 // pred_check_branch
          %415 = sbr.rel (%p413) target = $region52
        $region51: #{f1_conv2d.2} parent=47 // pred_region
          %s416 = smul.u32 2, %s24
          %p417 = scmp.lt.s32.totalorder %s23, 1
          %s418 = scalar_select %p417, %s23, 1
          %p419 = scmp.lt.s32.totalorder %s416, 1
          %s420 = scalar_select %p419, %s416, 1
          %s421 = smul.addr %s418, 2
          %s422 = sadd.s32 %s420, %s421
          %s423 = smul.addr %s422, 8
          %s424 = scalar_lea.vmem %s1, %s423
        $region52: #{f1_conv2d.2} parent=47 // pred_fallthru
          _
        // Predicated region
        $region53: #{f1_conv2d.2} parent=47 // pred_check
          %p425 = pneg %p109
        $region54: #{f1_conv2d.2} parent=47 // pred_check_branch
          %427 = sbr.rel (%p425) target = $region56
        $region55: #{f1_conv2d.2} parent=47 // pred_region
          %p428 = scmp.lt.s32.totalorder %s23, 1
          %s429 = scalar_select %p428, %s23, 1
          %s430 = smul.addr %s429, 4
          %s431 = scalar_lea.vmem %s2, %s430
        $region56: #{f1_conv2d.2} parent=47 // pred_fallthru
          _
      $region48: #{f1_conv2d.2} parent=5 // pred_fallthru
        _
    $region6: #{f1_conv2d.2} parent=1 // loop_footer
      %s16 = sadd.s32 1, %s12
    $region7: #{f1_conv2d.2} parent=1 // loop_footer_branch
      %11 = sbr.rel target = $region3
    $region8: #{f1_conv2d.2} parent=1 // loop_exit
      _
    %432 = vsyncpa [#allocation3], 1
    %s433 = scalar_lea.sflag [#allocation3], 1
    %434 = vsyncpa %s433, 1

// kernel: f1_conv2d.3
$region0: #{f1_conv2d.3}
  #allocation0 [shape = 'u32[]', space=smem, size = 0x4, offset = 0x4, fixed_abs, tag = 'smem constant byte address 0x4 - core index']
  #allocation1 [shape = 'u32[144,128]{1,0:T(1,128)}', space=vmem, size = 0x12000, scoped, tag = 'internal scratch']
  %s0 = inlined_call_operand.vmem [shape: f32[32,4], index: 0, kind: input, shape index: {}]
  %s1 = inlined_call_operand.vmem [shape: f32[32,4], index: 1, kind: input, shape index: {}]
  %s2 = inlined_call_operand.vmem [shape: f32[4,8], index: 2, kind: input, shape index: {}, may-alias: {2,3}]
  %s3 = inlined_call_operand.vmem [shape: f32[4,8], index: 3, kind: input, shape index: {}, may-alias: {2,3}]
  %s4 = inlined_call_operand.vmem [shape: f32[1,8], index: 4, kind: input, shape index: {}]
  %s5 = inlined_call_operand.vmem [shape: f32[32,8], index: 5, kind: output, shape index: {0}]
  %s6 = inlined_call_operand.vmem [shape: f32[32,8], index: 6, kind: output, shape index: {1}]
  %7 = xla_tuple %s5, %s6
  %s8 = sld [smem:[#allocation0]]
  $region38: #{f1_conv2d.3} parent=0
    _
  %s10 = ssub.s32 1, %s8
  %s11 = scalar_select 0, %s10, %s8
  // Predicated region
  $region2: #{f1_conv2d.3} parent=0 // pred_check
    _
  $region3: #{f1_conv2d.3} parent=0 // pred_check_branch
    %13 = sbr.rel (0) target = $region5
  $region4: #{f1_conv2d.3} parent=0 // pred_region
    _
  $region5: #{f1_conv2d.3} parent=0 // pred_fallthru
    _
  // Predicated region
  $region6: #{f1_conv2d.3} parent=0 // pred_check
    _
  $region7: #{f1_conv2d.3} parent=0 // pred_check_branch
    %15 = sbr.rel (0) target = $region9
  $region8: #{f1_conv2d.3} parent=0 // pred_region
    _
  $region9: #{f1_conv2d.3} parent=0 // pred_fallthru
    _
  // Predicated region
  $region10: #{f1_conv2d.3} parent=0 // pred_check
    _
  $region11: #{f1_conv2d.3} parent=0 // pred_check_branch
    %17 = sbr.rel (0) target = $region13
  $region12: #{f1_conv2d.3} parent=0 // pred_region
    _
  $region13: #{f1_conv2d.3} parent=0 // pred_fallthru
    _
  // Predicated region
  $region14: #{f1_conv2d.3} parent=0 // pred_check
    _
  $region15: #{f1_conv2d.3} parent=0 // pred_check_branch
    %19 = sbr.rel (0) target = $region17
  $region16: #{f1_conv2d.3} parent=0 // pred_region
    _
  $region17: #{f1_conv2d.3} parent=0 // pred_fallthru
    _
  // Predicated region
  $region18: #{f1_conv2d.3} parent=0 // pred_check
    _
  $region19: #{f1_conv2d.3} parent=0 // pred_check_branch
    %21 = sbr.rel (0) target = $region21
  $region20: #{f1_conv2d.3} parent=0 // pred_region
    _
  $region21: #{f1_conv2d.3} parent=0 // pred_fallthru
    _
  %v22 = vld [vmem:[%s4] sm:$0x1]
  %v23 = vld [vmem:[%s0] sm:$0xff]
  %v24 = vld [vmem:[%s0 + $0x8] sm:$0xff]
  %v25 = vld [vmem:[%s0 + $0x10] sm:$0xff]
  %v26 = vld [vmem:[%s0 + $0x18] sm:$0xff]
  %v27 = vld [vmem:[%s2] sm:$0xf]
  %v29 = vlaneseq
  %v30 = vshrl.u32 %v29, 7
  %v31 = vsub.s32 0, %v30
  %v32 = vrot.slane %v22, %v31
  %vm34 = vcmask 31744
  %v36 = vsel %vm34, %v23, 0
  %v39 = vsel %vm34, %v24, 0
  %v42 = vsel %vm34, %v25, 0
  %v45 = vsel %vm34, %v26, 0
  %vm47 = vcmask 1043456
  %v49 = vsel %vm47, %v27, 0
  %51 = vmatprep.subr.mxu0 0.0
  %52 = vmatpush1.msra.mxu0 %v49
  %53 = vmatprep.subr.mxu0 0.0
  %54 = vmatpush1.msra.mxu0 0.0
  %55 = vmatprep.subr.mxu0 0.0
  %56 = vmatpush1.msra.mxu0 0.0
  %57 = vmatprep.subr.mxu0 0.0
  %58 = vmatpush1.msra.mxu0 0.0
  %59 = vmatprep.subr.mxu0 0.0
  %60 = vmatpush1.msra.mxu0 0.0
  %61 = vmatprep.subr.mxu0 0.0
  %62 = vmatpush1.msra.mxu0 0.0
  %63 = vmatprep.subr.mxu0 0.0
  %64 = vmatpush1.msra.mxu0 0.0
  %65 = vmatprep.subr.mxu0 0.0
  %66 = vmatpush1.msra.mxu0 0.0
  %67 = vmatprep.subr.mxu0 0.0
  %68 = vmatpush1.msra.mxu0 0.0
  %69 = vmatprep.subr.mxu0 0.0
  %70 = vmatpush1.msra.mxu0 0.0
  %71 = vmatprep.subr.mxu0 0.0
  %72 = vmatpush1.msra.mxu0 0.0
  %73 = vmatprep.subr.mxu0 0.0
  %74 = vmatpush1.msra.mxu0 0.0
  %75 = vmatprep.subr.mxu0 0.0
  %76 = vmatpush1.msra.mxu0 0.0
  %77 = vmatprep.subr.mxu0 0.0
  %78 = vmatpush1.msra.mxu0 0.0
  %79 = vmatprep.subr.mxu0 0.0
  %80 = vmatpush1.msra.mxu0 0.0
  %81 = vmatprep.subr.mxu0 0.0
  %82 = vmatpush1.msra.mxu0 0.0
  %83 = vmatprep.subr.mxu0 0.0
  %84 = vmatpush1.msra.mxu0 0.0
  %85 = vmatprep.subr.mxu0 0.0
  %86 = vmatpush1.msra.mxu0 0.0
  %87 = vmatprep.subr.mxu0 0.0
  %88 = vmatpush1.msra.mxu0 0.0
  %89 = vmatprep.subr.mxu0 0.0
  %90 = vmatpush1.msra.mxu0 0.0
  %91 = vmatprep.subr.mxu0 0.0
  %92 = vmatpush1.msra.mxu0 0.0
  %93 = vmatprep.subr.mxu0 0.0
  %94 = vmatpush1.msra.mxu0 0.0
  %95 = vmatprep.subr.mxu0 0.0
  %96 = vmatpush1.msra.mxu0 0.0
  %97 = vmatprep.subr.mxu0 0.0
  %98 = vmatpush1.msra.mxu0 0.0
  %99 = vmatprep.subr.mxu0 0.0
  %100 = vmatpush1.msra.mxu0 0.0
  %101 = vmatprep.subr.mxu0 0.0
  %102 = vmatpush1.msra.mxu0 0.0
  %103 = vmatprep.subr.mxu0 0.0
  %104 = vmatpush1.msra.mxu0 0.0
  %105 = vmatprep.subr.mxu0 0.0
  %106 = vmatpush1.msra.mxu0 0.0
  %107 = vmatprep.subr.mxu0 0.0
  %108 = vmatpush1.msra.mxu0 0.0
  %109 = vmatprep.subr.mxu0 0.0
  %110 = vmatpush1.msra.mxu0 0.0
  %111 = vmatprep.subr.mxu0 0.0
  %112 = vmatpush1.msra.mxu0 0.0
  %113 = vmatprep.subr.mxu0 0.0
  %114 = vmatpush1.msra.mxu0 0.0
  %115 = vmatprep.mubr.f32.mxu0 0.0
  %116 = vmatmul.mubr.f32.gmra.mrb[0].mxu0 %v36
  %v117 = vpop.f32.mrb[0].mxu0
  %v118 = vadd.f32 %v32, %v117
  %v119 = vpop.f32.mrb[0].mxu0
  %120 = vmatprep.mubr.f32.mxu0 0.0
  %121 = vmatmul.mubr.f32.gmra.mrb[0].mxu0 %v39
  %v122 = vpop.f32.mrb[0].mxu0
  %v123 = vadd.f32 %v32, %v122
  %v124 = vpop.f32.mrb[0].mxu0
  %125 = vmatprep.mubr.f32.mxu0 0.0
  %126 = vmatmul.mubr.f32.gmra.mrb[0].mxu0 %v42
  %v127 = vpop.f32.mrb[0].mxu0
  %v128 = vadd.f32 %v32, %v127
  %v129 = vpop.f32.mrb[0].mxu0
  %130 = vmatprep.mubr.f32.mxu0 0.0
  %131 = vmatmul.mubr.f32.gmra.mrb[0].mxu0 %v45
  %v132 = vpop.f32.mrb[0].mxu0
  %v133 = vadd.f32 %v32, %v132
  %v134 = vpop.f32.mrb[0].mxu0
  %135 = vdwg.mxu0
  %v136 = vld [vmem:[%s1] sm:$0xff]
  %v137 = vld [vmem:[%s1 + $0x8] sm:$0xff]
  %v138 = vld [vmem:[%s1 + $0x10] sm:$0xff]
  %v139 = vld [vmem:[%s1 + $0x18] sm:$0xff]
  %v140 = vld [vmem:[%s3] sm:$0xf]
  %v142 = vsel %vm34, %v136, 0
  %v145 = vsel %vm34, %v137, 0
  %v148 = vsel %vm34, %v138, 0
  %v151 = vsel %vm34, %v139, 0
  %v154 = vsel %vm47, %v140, 0
  %156 = vmatprep.subr.mxu0 0.0
  %157 = vmatpush1.msra.mxu0 %v154
  %158 = vmatprep.subr.mxu0 0.0
  %159 = vmatpush1.msra.mxu0 0.0
  %160 = vmatprep.subr.mxu0 0.0
  %161 = vmatpush1.msra.mxu0 0.0
  %162 = vmatprep.subr.mxu0 0.0
  %163 = vmatpush1.msra.mxu0 0.0
  %164 = vmatprep.subr.mxu0 0.0
  %165 = vmatpush1.msra.mxu0 0.0
  %166 = vmatprep.subr.mxu0 0.0
  %167 = vmatpush1.msra.mxu0 0.0
  %168 = vmatprep.subr.mxu0 0.0
  %169 = vmatpush1.msra.mxu0 0.0
  %170 = vmatprep.subr.mxu0 0.0
  %171 = vmatpush1.msra.mxu0 0.0
  %172 = vmatprep.subr.mxu0 0.0
  %173 = vmatpush1.msra.mxu0 0.0
  %174 = vmatprep.subr.mxu0 0.0
  %175 = vmatpush1.msra.mxu0 0.0
  %176 = vmatprep.subr.mxu0 0.0
  %177 = vmatpush1.msra.mxu0 0.0
  %178 = vmatprep.subr.mxu0 0.0
  %179 = vmatpush1.msra.mxu0 0.0
  %180 = vmatprep.subr.mxu0 0.0
  %181 = vmatpush1.msra.mxu0 0.0
  %182 = vmatprep.subr.mxu0 0.0
  %183 = vmatpush1.msra.mxu0 0.0
  %184 = vmatprep.subr.mxu0 0.0
  %185 = vmatpush1.msra.mxu0 0.0
  %186 = vmatprep.subr.mxu0 0.0
  %187 = vmatpush1.msra.mxu0 0.0
  %188 = vmatprep.subr.mxu0 0.0
  %189 = vmatpush1.msra.mxu0 0.0
  %190 = vmatprep.subr.mxu0 0.0
  %191 = vmatpush1.msra.mxu0 0.0
  %192 = vmatprep.subr.mxu0 0.0
  %193 = vmatpush1.msra.mxu0 0.0
  %194 = vmatprep.subr.mxu0 0.0
  %195 = vmatpush1.msra.mxu0 0.0
  %196 = vmatprep.subr.mxu0 0.0
  %197 = vmatpush1.msra.mxu0 0.0
  %198 = vmatprep.subr.mxu0 0.0
  %199 = vmatpush1.msra.mxu0 0.0
  %200 = vmatprep.subr.mxu0 0.0
  %201 = vmatpush1.msra.mxu0 0.0
  %202 = vmatprep.subr.mxu0 0.0
  %203 = vmatpush1.msra.mxu0 0.0
  %204 = vmatprep.subr.mxu0 0.0
  %205 = vmatpush1.msra.mxu0 0.0
  %206 = vmatprep.subr.mxu0 0.0
  %207 = vmatpush1.msra.mxu0 0.0
  %208 = vmatprep.subr.mxu0 0.0
  %209 = vmatpush1.msra.mxu0 0.0
  %210 = vmatprep.subr.mxu0 0.0
  %211 = vmatpush1.msra.mxu0 0.0
  %212 = vmatprep.subr.mxu0 0.0
  %213 = vmatpush1.msra.mxu0 0.0
  %214 = vmatprep.subr.mxu0 0.0
  %215 = vmatpush1.msra.mxu0 0.0
  %216 = vmatprep.subr.mxu0 0.0
  %217 = vmatpush1.msra.mxu0 0.0
  %218 = vmatprep.subr.mxu0 0.0
  %219 = vmatpush1.msra.mxu0 0.0
  %220 = vmatprep.mubr.f32.mxu0 0.0
  %221 = vmatmul.mubr.f32.gmra.mrb[0].mxu0 %v142
  %v222 = vpop.f32.mrb[0].mxu0
  %v223 = vadd.f32 %v32, %v222
  %v224 = vpop.f32.mrb[0].mxu0
  %225 = vmatprep.mubr.f32.mxu0 0.0
  %226 = vmatmul.mubr.f32.gmra.mrb[0].mxu0 %v145
  %v227 = vpop.f32.mrb[0].mxu0
  %v228 = vadd.f32 %v32, %v227
  %v229 = vpop.f32.mrb[0].mxu0
  %230 = vmatprep.mubr.f32.mxu0 0.0
  %231 = vmatmul.mubr.f32.gmra.mrb[0].mxu0 %v148
  %v232 = vpop.f32.mrb[0].mxu0
  %v233 = vadd.f32 %v32, %v232
  %v234 = vpop.f32.mrb[0].mxu0
  %235 = vmatprep.mubr.f32.mxu0 0.0
  %236 = vmatmul.mubr.f32.gmra.mrb[0].mxu0 %v151
  %v237 = vpop.f32.mrb[0].mxu0
  %v238 = vadd.f32 %v32, %v237
  %v239 = vpop.f32.mrb[0].mxu0
  %240 = vdwg.mxu0
  %vm241 = vcmask 64512
  %242 = vst.msk [vmem:[%s5] sm:$0xff] %vm241, %v118
  %243 = vst.msk [vmem:[%s5 + $0x8] sm:$0xff] %vm241, %v123
  %244 = vst.msk [vmem:[%s5 + $0x10] sm:$0xff] %vm241, %v128
  %245 = vst.msk [vmem:[%s5 + $0x18] sm:$0xff] %vm241, %v133
  %246 = vst.msk [vmem:[%s6] sm:$0xff] %vm241, %v223
  %247 = vst.msk [vmem:[%s6 + $0x8] sm:$0xff] %vm241, %v228
  %248 = vst.msk [vmem:[%s6 + $0x10] sm:$0xff] %vm241, %v233
  %249 = vst.msk [vmem:[%s6 + $0x18] sm:$0xff] %vm241, %v238
  // Predicated region
  $region22: #{f1_conv2d.3} parent=0 // pred_check
    _
  $region23: #{f1_conv2d.3} parent=0 // pred_check_branch
    %251 = sbr.rel (0) target = $region25
  $region24: #{f1_conv2d.3} parent=0 // pred_region
    _
  $region25: #{f1_conv2d.3} parent=0 // pred_fallthru
    _
  // Predicated region
  $region26: #{f1_conv2d.3} parent=0 // pred_check
    _
  $region27: #{f1_conv2d.3} parent=0 // pred_check_branch
    %253 = sbr.rel (0) target = $region29
  $region28: #{f1_conv2d.3} parent=0 // pred_region
    _
  $region29: #{f1_conv2d.3} parent=0 // pred_fallthru
    _
  // Predicated region
  $region30: #{f1_conv2d.3} parent=0 // pred_check
    _
  $region31: #{f1_conv2d.3} parent=0 // pred_check_branch
    %255 = sbr.rel (0) target = $region33
  $region32: #{f1_conv2d.3} parent=0 // pred_region
    _
  $region33: #{f1_conv2d.3} parent=0 // pred_fallthru
    _
  // Predicated region
  $region34: #{f1_conv2d.3} parent=0 // pred_check
    _
  $region35: #{f1_conv2d.3} parent=0 // pred_check_branch
    %257 = sbr.rel (0) target = $region37
  $region36: #{f1_conv2d.3} parent=0 // pred_region
    _
  $region37: #{f1_conv2d.3} parent=0 // pred_fallthru
    _

</llo_original>
